<compile_context>
chip_gen: v6e
topology: v6e:2x2x1
jax: 0.10.0
libtpu: 0.0.40
codegen_flags: <defaults>
</compile_context>

<pallas_src>
import jax
import jax.numpy as jnp
from jax.experimental import pallas as pl
from jax.experimental.pallas import tpu as pltpu


_LANE_CANDIDATES = (2048, 1024, 512, 256, 128)


def _choose_lane(n_elems):
    """Largest lane width (multiple of 128) dividing n_elems, preferring a row
    count that is a multiple of 8 (full sublane occupancy)."""
    for lane in _LANE_CANDIDATES:
        if n_elems % lane == 0 and (n_elems // lane) % 8 == 0:
            return lane
    for lane in _LANE_CANDIDATES:
        if n_elems % lane == 0:
            return lane
    return None


def _choose_tr(rows, lane, block_elems):
    """Rows per grid step.  Returns (tr, need_mask)."""
    full_fit = (block_elems // lane) >= rows
    if rows <= 8 or (full_fit and rows < 16):
        # Single block equal to the full array (legal regardless of (8,128)).
        return rows, False
    target = min(rows, max(8, block_elems // lane))
    if full_fit:
        # rows >= 16 but everything fits in one block: split in two anyway so
        # the "parallel" grid axis can feed both TensorCores on v7x.
        target = (rows + 1) // 2
    target = max(8, (target // 8) * 8)
    # Prefer a multiple-of-8 tr that divides rows exactly: no ragged last
    # block -> no masking anywhere.
    for tr in range(target, 7, -8):
        if rows % tr == 0:
            return tr, False
    return target, True  # ragged last block; mask only that one


def _make_bce_partial_kernel(tr, lane, ar, n_valid, need_mask, hard_targets):
    """Per grid step: fold one (tr, lane) block of pred/target into an
    (ar, 128) partial sum of the element-wise BCE loss."""

    def elementwise_loss(p, t):
        if hard_targets:
            # Valid only for exactly-0/1 targets; halves transcendental count.
            p_correct = jnp.where(t > 0.5, p, 1.0 - p)
            return -jnp.maximum(jnp.log(p_correct), jnp.float32(-100.0))
        log_p = jnp.maximum(jnp.log(p), jnp.float32(-100.0))
        log_1mp = jnp.maximum(jnp.log1p(-p), jnp.float32(-100.0))
        # == -(t*log_p + (1-t)*log_1mp) with the per-term clamp already applied.
        return -(log_1mp + t * (log_p - log_1mp))

    def partial_sum(p_ref, t_ref, masked):
        acc = None
        # Compute-and-accumulate per ar-row chunk: no full-(tr, lane) loss temp.
        for r0 in range(0, tr, ar):
            p = p_ref[r0:r0 + ar, :].astype(jnp.float32)
            t = t_ref[r0:r0 + ar, :].astype(jnp.float32)
            loss = elementwise_loss(p, t)
            if masked:
                k = pl.program_id(0)
                r_ids = (jax.lax.broadcasted_iota(jnp.int32, (ar, lane), 0)
                         + k * tr + r0)
                c_ids = jax.lax.broadcasted_iota(jnp.int32, (ar, lane), 1)
                valid = r_ids * lane + c_ids < n_valid
                # True select (not multiply): OOB garbage / NaN never leaks.
                loss = jnp.where(valid, loss, jnp.float32(0.0))
            acc = loss if acc is None else acc + loss
        # Fold lane -> 128-wide partial: single-vreg VPU adds, and the stored
        # block stays exactly lane-dense (unmasked vst, 4 KiB writeback).
        folded = acc[:, 0:128]
        for c0 in range(128, lane, 128):
            folded = folded + acc[:, c0:c0 + 128]
        return folded

    def kernel(p_ref, t_ref, out_ref):
        if not need_mask:
            out_ref[0] = partial_sum(p_ref, t_ref, False)
        else:
            is_last = pl.program_id(0) == pl.num_programs(0) - 1

            @pl.when(jnp.logical_not(is_last))
            def _():
                out_ref[0] = partial_sum(p_ref, t_ref, False)

            @pl.when(is_last)
            def _():
                out_ref[0] = partial_sum(p_ref, t_ref, True)

    return kernel


def bce_loss(pred, target, *, block_elems=1 << 19, hard_targets=False):
    """Mean BCE over all elements of pred/target (any matching shapes)."""
    assert pred.shape == target.shape, (pred.shape, target.shape)
    n_valid = pred.size

    p_flat = pred.reshape(-1)
    t_flat = target.reshape(-1)

    # Pad only a <128-element tail with (pred=1, target=1): that pair yields
    # exactly 0 loss under the -100 clamp, so no mask is needed for it and we
    # never copy/pad the full tensors.
    pad = (-n_valid) % 128
    if pad:
        p_flat = jnp.pad(p_flat, (0, pad), constant_values=1.0)
        t_flat = jnp.pad(t_flat, (0, pad), constant_values=1.0)
    n_padded = n_valid + pad

    lane = _choose_lane(n_padded)
    rows = n_padded // lane
    p2 = p_flat.reshape(rows, lane)
    t2 = t_flat.reshape(rows, lane)

    tr, need_mask = _choose_tr(rows, lane, block_elems)
    num_blocks = pl.cdiv(rows, tr)
    ar = 8 if tr % 8 == 0 else tr  # partial-sum rows (static)

    kernel = _make_bce_partial_kernel(tr, lane, ar, n_valid, need_mask,
                                      hard_targets)

    partials = pl.pallas_call(
        kernel,
        out_shape=jax.ShapeDtypeStruct((num_blocks, ar, 128), jnp.float32),
        grid=(num_blocks,),
        in_specs=[
            pl.BlockSpec((tr, lane), lambda k: (k, 0)),
            pl.BlockSpec((tr, lane), lambda k: (k, 0)),
        ],
        out_specs=pl.BlockSpec((1, ar, 128), lambda k: (k, 0, 0)),
        compiler_params=pltpu.CompilerParams(
            dimension_semantics=("parallel",),
            vmem_limit_bytes=32 * 1024 * 1024,
        ),
    )(p2, t2)

    # Tiny final reduction + mean in plain JAX.
    return jnp.sum(partials) / jnp.float32(n_valid)


def _bce_reference(pred, target):
    p = pred.astype(jnp.float32)
    t = target.astype(jnp.float32)
    log_p = jnp.maximum(jnp.log(p), -100.0)
    log_1mp = jnp.maximum(jnp.log1p(-p), -100.0)
    return jnp.mean(-(t * log_p + (1.0 - t) * log_1mp))


if __name__ == "__main__":
    key = jax.random.PRNGKey(0)
    k1, k2 = jax.random.split(key)
    # NCHW inputs, as the PyTorch module would receive.
    shape = (2, 4, 16, 16)
    pred = jax.nn.sigmoid(jax.random.normal(k1, shape, dtype=jnp.float32))
    target = (jax.random.uniform(k2, shape) > 0.5).astype(jnp.float32)

    loss = bce_loss(pred, target)
    loss = jax.block_until_ready(loss)

    ref = _bce_reference(pred, target)
    assert jnp.allclose(loss, ref, atol=1e-5, rtol=1e-5), (loss, ref)
    print("KERNEL_OK")
</pallas_src>

<mosaic_0001>
module attributes {stable_mosaic.version = 11 : i64} {
  func.func @kernel(%arg0: i32, %arg1: memref<8x256xf32, #tpu.memory_space<vmem>>, %arg2: memref<8x256xf32, #tpu.memory_space<vmem>>, %arg3: memref<1x8x128xf32, #tpu.memory_space<vmem>>) attributes {dimension_semantics = [#tpu.dimension_semantics<parallel>], iteration_bounds = array<i64: 1>, scalar_prefetch = 0 : i64, scratch_operands = 0 : i64, tpu.core_type = #tpu.core_type<tc>, window_params = [{transform_indices = @transform_0, window_bounds = array<i64: 8, 256>}, {transform_indices = @transform_1, window_bounds = array<i64: 8, 256>}, {transform_indices = @transform_2, window_bounds = array<i64: 1, 8, 128>}]} {
    %c0 = arith.constant 0 : index
    %c0_0 = arith.constant 0 : index
    %0 = vector.load %arg1[%c0, %c0_0] : memref<8x256xf32, #tpu.memory_space<vmem>>, vector<8x256xf32>
    %c0_1 = arith.constant 0 : index
    %c0_2 = arith.constant 0 : index
    %1 = vector.load %arg2[%c0_1, %c0_2] : memref<8x256xf32, #tpu.memory_space<vmem>>, vector<8x256xf32>
    %2 = math.log %0 : vector<8x256xf32>
    %cst = arith.constant -1.000000e+02 : f32
    %3 = vector.broadcast %cst : f32 to vector<8x256xf32>
    %4 = arith.maximumf %2, %3 : vector<8x256xf32>
    %cst_3 = arith.constant 0.000000e+00 : f32
    %5 = vector.broadcast %cst_3 : f32 to vector<8x256xf32>
    %6 = arith.subf %5, %0 : vector<8x256xf32>
    %7 = math.log1p %6 : vector<8x256xf32>
    %cst_4 = arith.constant -1.000000e+02 : f32
    %8 = vector.broadcast %cst_4 : f32 to vector<8x256xf32>
    %9 = arith.maximumf %7, %8 : vector<8x256xf32>
    %10 = arith.subf %4, %9 : vector<8x256xf32>
    %11 = arith.mulf %1, %10 : vector<8x256xf32>
    %12 = arith.addf %9, %11 : vector<8x256xf32>
    %cst_5 = arith.constant 0.000000e+00 : f32
    %13 = vector.broadcast %cst_5 : f32 to vector<8x256xf32>
    %14 = arith.subf %13, %12 : vector<8x256xf32>
    %15 = vector.extract_strided_slice %14 {offsets = [0, 0], sizes = [8, 128], strides = [1, 1]} : vector<8x256xf32> to vector<8x128xf32>
    %16 = vector.extract_strided_slice %14 {offsets = [0, 128], sizes = [8, 128], strides = [1, 1]} : vector<8x256xf32> to vector<8x128xf32>
    %17 = arith.addf %15, %16 : vector<8x128xf32>
    %c0_6 = arith.constant 0 : index
    %c0_7 = arith.constant 0 : index
    %c0_8 = arith.constant 0 : index
    %18 = vector.load %arg3[%c0_6, %c0_7, %c0_8] : memref<1x8x128xf32, #tpu.memory_space<vmem>>, vector<1x8x128xf32>
    %19 = vector.shape_cast %18 : vector<1x8x128xf32> to vector<8x128xf32>
    %20 = vector.shape_cast %17 : vector<8x128xf32> to vector<1x8x128xf32>
    tpu.vector_store %arg3[%c0_6, %c0_7, %c0_8], %20 {strides = array<i32>} : memref<1x8x128xf32, #tpu.memory_space<vmem>>, vector<1x8x128xf32>,
    return
  }
  func.func @transform_0(%arg0: i32) -> (i32, i32) {
    %c0_i32 = arith.constant 0 : i32
    %c0_i32_0 = arith.constant 0 : i32
    return %arg0, %c0_i32 : i32, i32
  }
  func.func @transform_1(%arg0: i32) -> (i32, i32) {
    %c0_i32 = arith.constant 0 : i32
    %c0_i32_0 = arith.constant 0 : i32
    return %arg0, %c0_i32 : i32, i32
  }
  func.func @transform_2(%arg0: i32) -> (i32, i32, i32) {
    %c0_i32 = arith.constant 0 : i32
    %c0_i32_0 = arith.constant 0 : i32
    %c0_i32_1 = arith.constant 0 : i32
    return %arg0, %c0_i32, %c0_i32_0 : i32, i32, i32
  }
}

</mosaic_0001>

<llo_original>
// kernel: tpu_custom_call.1
$region0: #{tpu_custom_call.1}
  #allocation0 [shape = 'u32[]', space=smem, size = 0x4, offset = 0x4, fixed_abs, tag = 'smem constant byte address 0x4 - core index']
  #allocation1 [shape = 'u32[144,128]{1,0:T(1,128)}', space=vmem, size = 0x12000, scoped, tag = 'internal scratch']
  %s0 = inlined_call_operand.hbm [shape: f32[8,256], index: 0, kind: input, shape index: {}]
  %s1 = inlined_call_operand.hbm [shape: f32[8,256], index: 1, kind: input, shape index: {}]
  %s2 = inlined_call_operand.hbm [shape: f32[1,8,128], index: 2, kind: output, shape index: {}]
  %s3 = sld [smem:[#allocation0]]
  $region26: #{tpu_custom_call.1} parent=0
    _
  %s5 = ssub.s32 1, %s3
  %s6 = scalar_select 0, %s5, %s3
  $region1: #{tpu_custom_call.1} parent=0
    #allocation2 [shape = 'u8[8192]{0}', space=vmem, size = 0x2000, scoped, tag = 'input window, operand 0, single buffered']
    #allocation3 [shape = 's32[1]{0}', space=sflag, size = 0x4, scoped, tag = 'scoped memory for tpu_custom_call.1']
    #allocation4 [shape = 's32[1]{0}', space=sflag, size = 0x4, scoped, tag = 'scoped memory for tpu_custom_call.1']
    #allocation5 [shape = 'u8[8192]{0}', space=vmem, size = 0x2000, scoped, tag = 'input window, operand 1, single buffered']
    #allocation6 [shape = 's32[1]{0}', space=sflag, size = 0x4, scoped, tag = 'scoped memory for tpu_custom_call.1']
    #allocation7 [shape = 'u8[4096]{0}', space=vmem, size = 0x1000, scoped, tag = 'output window, operand 0, single buffered']
    %7 = vsyncpa [#allocation3], 0
    %8 = vsyncpa [#allocation6], 0
    %9 = vsyncpa [#allocation4], 0
    // Predicated region
    $region2: #{tpu_custom_call.1} parent=1 // pred_check
      _
    $region3: #{tpu_custom_call.1} parent=1 // pred_check_branch
      %11 = sbr.rel (0) target = $region5
    $region4: #{tpu_custom_call.1} parent=1 // pred_region
      %s13 = ssub.s32 256, 256
      %14 = vsyncadd [#allocation3], %s13
      %s16 = sshll.u32 [#allocation2], 4
      %s17 = int_to_ptr.vmem [resolvable:$true] %s16
      %19 = dma.hbm_to_vmem [thread:$0]  %s0, 256, %s17, [#allocation3]
    $region5: #{tpu_custom_call.1} parent=1 // pred_fallthru
      _
    // Predicated region
    $region6: #{tpu_custom_call.1} parent=1 // pred_check
      _
    $region7: #{tpu_custom_call.1} parent=1 // pred_check_branch
      %21 = sbr.rel (0) target = $region9
    $region8: #{tpu_custom_call.1} parent=1 // pred_region
      %s23 = ssub.s32 256, 256
      %24 = vsyncadd [#allocation6], %s23
      %s26 = sshll.u32 [#allocation5], 4
      %s27 = int_to_ptr.vmem [resolvable:$true] %s26
      %29 = dma.hbm_to_vmem [thread:$0]  %s1, 256, %s27, [#allocation6]
    $region9: #{tpu_custom_call.1} parent=1 // pred_fallthru
      _
    // Predicated region
    $region10: #{tpu_custom_call.1} parent=1 // pred_check
      _
    $region11: #{tpu_custom_call.1} parent=1 // pred_check_branch
      %31 = sbr.rel (0) target = $region13
    $region12: #{tpu_custom_call.1} parent=1 // pred_region
      %32 = dma.done [#allocation3], 256
    $region13: #{tpu_custom_call.1} parent=1 // pred_fallthru
      _
    // Predicated region
    $region14: #{tpu_custom_call.1} parent=1 // pred_check
      _
    $region15: #{tpu_custom_call.1} parent=1 // pred_check_branch
      %34 = sbr.rel (0) target = $region17
    $region16: #{tpu_custom_call.1} parent=1 // pred_region
      %35 = dma.done [#allocation6], 256
    $region17: #{tpu_custom_call.1} parent=1 // pred_fallthru
      _
    %v36 = vld [vmem:[#allocation2] sm:$0xff]
    %v37 = vld [vmem:[#allocation2 + $0x8] sm:$0xff]
    %v38 = vld [vmem:[#allocation5] sm:$0xff]
    %v39 = vld [vmem:[#allocation5 + $0x8] sm:$0xff]
    %v40 = vlog2.pop %v36
    %v41 = vmul.f32 %v40, 0.6931472
    %v42 = vlog2.pop %v37
    %v43 = vmul.f32 %v42, 0.6931472
    %v44 = vmax.f32 %v41, -100.0
    %v45 = vmax.f32 %v43, -100.0
    %v46 = vsub.f32 0.0, %v36
    %v47 = vsub.f32 0.0, %v37
    %v48 = vadd.f32 %v46, 1.0
    %v49 = vlog2.pop %v48
    %v50 = vmul.f32 %v49, 0.6931472
    %v51 = vmul.f32 -0.5, %v46
    %v52 = vadd.f32 %v51, 1.0
    %v53 = vmul.f32 %v52, %v46
    %v54 = vand.u32 2147483647, %v46
    %vm55 = vcmp.lt.f32.partialorder %v54, 0.0004427343
    %v56 = vsel %vm55, %v53, %v50
    %v57 = vadd.f32 %v47, 1.0
    %v58 = vlog2.pop %v57
    %v59 = vmul.f32 %v58, 0.6931472
    %v60 = vmul.f32 -0.5, %v47
    %v61 = vadd.f32 %v60, 1.0
    %v62 = vmul.f32 %v61, %v47
    %v63 = vand.u32 2147483647, %v47
    %vm64 = vcmp.lt.f32.partialorder %v63, 0.0004427343
    %v65 = vsel %vm64, %v62, %v59
    %v66 = vmax.f32 %v56, -100.0
    %v67 = vmax.f32 %v65, -100.0
    %v68 = vsub.f32 %v44, %v66
    %v69 = vsub.f32 %v45, %v67
    %v70 = vmul.f32 %v38, %v68
    %v71 = vmul.f32 %v39, %v69
    %v72 = vadd.f32 %v66, %v70
    %v73 = vadd.f32 %v67, %v71
    %v74 = vsub.f32 0.0, %v72
    %v75 = vsub.f32 0.0, %v73
    %v76 = vadd.f32 %v74, %v75
    %77 = vst [vmem:[#allocation7] sm:$0xff] %v76
    // Predicated region
    $region18: #{tpu_custom_call.1} parent=1 // pred_check
      _
    $region19: #{tpu_custom_call.1} parent=1 // pred_check_branch
      %79 = sbr.rel (0) target = $region21
    $region20: #{tpu_custom_call.1} parent=1 // pred_region
      %s81 = ssub.s32 128, 128
      %82 = vsyncadd [#allocation4], %s81
      %s84 = sshll.u32 [#allocation7], 4
      %s85 = int_to_ptr.vmem [resolvable:$true] %s84
      %87 = dma.vmem_to_hbm [thread:$0]  %s85, 128, %s2, [#allocation4]
    $region21: #{tpu_custom_call.1} parent=1 // pred_fallthru
      _
    // Predicated region
    $region22: #{tpu_custom_call.1} parent=1 // pred_check
      _
    $region23: #{tpu_custom_call.1} parent=1 // pred_check_branch
      %89 = sbr.rel (0) target = $region25
    $region24: #{tpu_custom_call.1} parent=1 // pred_region
      %90 = dma.done [#allocation4], 128
    $region25: #{tpu_custom_call.1} parent=1 // pred_fallthru
      _
    %91 = vsyncpa [#allocation3], 1
    %92 = vsyncpa [#allocation6], 1
    %93 = vsyncpa [#allocation4], 1

</llo_original>
